<compile_context>
chip_gen: v7x
topology: tpu7x:2x2x1
jax: 0.10.0
libtpu: 0.0.40
codegen_flags: <defaults>
</compile_context>

<pallas_src>
import math
import functools

import jax
import jax.numpy as jnp
from jax.experimental import pallas as pl
from jax.experimental.pallas import tpu as pltpu


HEAD_NAMES = ("x_out", "y_out", "rot_out", "key_out",
              "door_opened_out", "door_unlocked_out")

H_PAD = 128      # padded hidden width (lane-dense)
OUT_PAD = 128    # padded fused-head output width (lane-dense)


def _round_up(n, m):
    return ((n + m - 1) // m) * m


def _mlp_multihead_kernel(x_ref, w1_ref, b1_ref, w2_ref, b2_ref,
                          wh_ref, bh_ref, out_ref):
    # l1 + ReLU   ([TB, in] @ [in, 128] + [1, 128])
    h = jnp.dot(x_ref[...], w1_ref[...],
                preferred_element_type=jnp.float32) + b1_ref[...]
    h = jnp.maximum(h, 0.0)
    # l2 (no activation, matching the torch forward)
    h = jnp.dot(h, w2_ref[...],
                preferred_element_type=jnp.float32) + b2_ref[...]
    # all 6 heads fused into one lane-dense [TB, 128] matmul + store
    out = jnp.dot(h, wh_ref[...],
                  preferred_element_type=jnp.float32) + bh_ref[...]
    out_ref[...] = out.astype(out_ref.dtype)


@functools.partial(jax.jit, static_argnames=("input_size", "total_out"))
def _fused_forward(x, w1, b1, w2, b2, wh, bh, *, input_size, total_out):
    B = x.shape[0]

    # Pick a batch tile: large enough to amortize per-step overhead, small enough
    # to keep VMEM bounded (TB=512 -> ~2*(512*in + 512*128)*4B + ~100KB of weights).
    TB = min(512, _round_up(B, 8))
    B_pad = _round_up(B, TB)
    if B_pad != B:
        x = jnp.pad(x, ((0, B_pad - B), (0, 0)))

    grid = (B_pad // TB,)

    flops = 2 * B_pad * (input_size * H_PAD + H_PAD * H_PAD + H_PAD * OUT_PAD)
    bytes_accessed = 4 * (B_pad * input_size + B_pad * OUT_PAD
                          + input_size * H_PAD + H_PAD * H_PAD + H_PAD * OUT_PAD
                          + 3 * H_PAD)

    fused_pad = pl.pallas_call(
        _mlp_multihead_kernel,
        out_shape=jax.ShapeDtypeStruct((B_pad, OUT_PAD), jnp.float32),
        grid=grid,
        in_specs=[
            pl.BlockSpec((TB, input_size), lambda i: (i, 0)),     # x (pipelined)
            pl.BlockSpec((input_size, H_PAD), lambda i: (0, 0)),  # w1 (resident)
            pl.BlockSpec((1, H_PAD), lambda i: (0, 0)),           # b1
            pl.BlockSpec((H_PAD, H_PAD), lambda i: (0, 0)),       # w2
            pl.BlockSpec((1, H_PAD), lambda i: (0, 0)),           # b2
            pl.BlockSpec((H_PAD, OUT_PAD), lambda i: (0, 0)),     # wh (all heads)
            pl.BlockSpec((1, OUT_PAD), lambda i: (0, 0)),         # bh
        ],
        out_specs=pl.BlockSpec((TB, OUT_PAD), lambda i: (i, 0)),
        compiler_params=pltpu.CompilerParams(
            dimension_semantics=("parallel",)),
        cost_estimate=pl.CostEstimate(flops=flops, transcendentals=0,
                                      bytes_accessed=bytes_accessed),
    )(x, w1, b1, w2, b2, wh, bh)

    # Trim batch padding + lane padding of the fused output slab.
    return fused_pad[:B, :total_out]


def nn_multihead_forward(x, params, out_sizes):
    """x: [B, input_size] float32.  params: dict of pre-transposed, padded weights."""
    total_out = sum(out_sizes[n] for n in HEAD_NAMES)
    fused = _fused_forward(
        x, params["w1"], params["b1"], params["w2"], params["b2"],
        params["wh"], params["bh"],
        input_size=x.shape[1], total_out=total_out)

    # Split fused output back into the 6 heads (plain-JAX glue).
    outs, off = [], 0
    for name in HEAD_NAMES:
        n = out_sizes[name]
        outs.append(fused[:, off:off + n])
        off += n
    return tuple(outs)


def _init_linear(key, fan_in, fan_out):
    """Deterministic init mimicking torch.nn.Linear's U(-1/sqrt(fan_in), ...).
    Returns (W_transposed [fan_in, fan_out], b [1, fan_out])."""
    kw, kb = jax.random.split(key)
    bound = 1.0 / math.sqrt(fan_in)
    w = jax.random.uniform(kw, (fan_in, fan_out), jnp.float32, -bound, bound)
    b = jax.random.uniform(kb, (1, fan_out), jnp.float32, -bound, bound)
    return w, b


def make_params(key, input_size, hidden_size, out_sizes):
    """Build pre-transposed + zero-padded params.

    Padding is exact: extra hidden columns carry zero weights/biases (stay 0
    through relu), and the corresponding rows of w2/wh are zero, so padded
    lanes never contribute to real outputs.
    """
    assert hidden_size <= H_PAD
    keys = jax.random.split(key, 8)
    w1, b1 = _init_linear(keys[0], input_size, hidden_size)
    w2, b2 = _init_linear(keys[1], hidden_size, hidden_size)

    head_ws, head_bs = [], []
    for i, name in enumerate(HEAD_NAMES):
        w, b = _init_linear(keys[2 + i], hidden_size, out_sizes[name])
        head_ws.append(w)
        head_bs.append(b)
    wh = jnp.concatenate(head_ws, axis=1)   # [hidden, total_out]
    bh = jnp.concatenate(head_bs, axis=1)   # [1, total_out]
    total_out = wh.shape[1]
    assert total_out <= OUT_PAD

    hp = H_PAD - hidden_size
    op = OUT_PAD - total_out
    return {
        # unpadded copies (for the pure-JAX reference check)
        "w1_raw": w1, "b1_raw": b1, "w2_raw": w2, "b2_raw": b2,
        "wh_raw": wh, "bh_raw": bh,
        # lane-padded versions consumed by the kernel
        "w1": jnp.pad(w1, ((0, 0), (0, hp))),          # [in, 128]
        "b1": jnp.pad(b1, ((0, 0), (0, hp))),          # [1, 128]
        "w2": jnp.pad(w2, ((0, hp), (0, hp))),         # [128, 128]
        "b2": jnp.pad(b2, ((0, 0), (0, hp))),          # [1, 128]
        "wh": jnp.pad(wh, ((0, hp), (0, op))),         # [128, 128]
        "bh": jnp.pad(bh, ((0, 0), (0, op))),          # [1, 128]
    }


def _reference_forward(x, params, out_sizes):
    """Pure-JAX reference (unpadded weights) for correctness check."""
    h = jnp.maximum(x @ params["w1_raw"] + params["b1_raw"], 0.0)
    h = h @ params["w2_raw"] + params["b2_raw"]
    fused = h @ params["wh_raw"] + params["bh_raw"]
    outs, off = [], 0
    for name in HEAD_NAMES:
        n = out_sizes[name]
        outs.append(fused[:, off:off + n])
        off += n
    return tuple(outs)


if __name__ == "__main__":
    input_size = 32
    hidden_size = 32
    out_sizes = {
        "x_out": 16,
        "y_out": 16,
        "rot_out": 4,
        "key_out": 2,
        "door_opened_out": 2,
        "door_unlocked_out": 2,
    }
    batch = 8

    key = jax.random.PRNGKey(0)
    k_x, k_p = jax.random.split(key)
    x = jax.random.normal(k_x, (batch, input_size), dtype=jnp.float32)
    params = make_params(k_p, input_size, hidden_size, out_sizes)

    outs = nn_multihead_forward(x, params, out_sizes)
    outs = jax.block_until_ready(outs)

    # sanity check against pure-JAX reference
    refs = _reference_forward(x, params, out_sizes)
    for o, r in zip(outs, refs):
        assert o.shape == r.shape
        assert jnp.max(jnp.abs(o - r)) < 1e-4

    print("KERNEL_OK")
</pallas_src>

<mosaic_0001>
module attributes {stable_mosaic.version = 11 : i64} {
  func.func @_mlp_multihead_kernel(%arg0: i32, %arg1: memref<8x32xf32, #tpu.memory_space<vmem>>, %arg2: memref<32x128xf32, #tpu.memory_space<vmem>>, %arg3: memref<1x128xf32, #tpu.memory_space<vmem>>, %arg4: memref<128x128xf32, #tpu.memory_space<vmem>>, %arg5: memref<1x128xf32, #tpu.memory_space<vmem>>, %arg6: memref<128x128xf32, #tpu.memory_space<vmem>>, %arg7: memref<1x128xf32, #tpu.memory_space<vmem>>, %arg8: memref<8x128xf32, #tpu.memory_space<vmem>>) attributes {dimension_semantics = [#tpu.dimension_semantics<parallel>], iteration_bounds = array<i64: 1>, scalar_prefetch = 0 : i64, scratch_operands = 0 : i64, tpu.core_type = #tpu.core_type<tc>, window_params = [{transform_indices = @transform_0, window_bounds = array<i64: 8, 32>}, {pipeline_mode = #tpu.pipeline_mode<synchronous>, transform_indices = @transform_1, window_bounds = array<i64: 32, 128>}, {pipeline_mode = #tpu.pipeline_mode<synchronous>, transform_indices = @transform_2, window_bounds = array<i64: 1, 128>}, {pipeline_mode = #tpu.pipeline_mode<synchronous>, transform_indices = @transform_3, window_bounds = array<i64: 128, 128>}, {pipeline_mode = #tpu.pipeline_mode<synchronous>, transform_indices = @transform_4, window_bounds = array<i64: 1, 128>}, {pipeline_mode = #tpu.pipeline_mode<synchronous>, transform_indices = @transform_5, window_bounds = array<i64: 128, 128>}, {pipeline_mode = #tpu.pipeline_mode<synchronous>, transform_indices = @transform_6, window_bounds = array<i64: 1, 128>}, {transform_indices = @transform_7, window_bounds = array<i64: 8, 128>}]} {
    %c0 = arith.constant 0 : index
    %c0_0 = arith.constant 0 : index
    %0 = vector.load %arg1[%c0, %c0_0] : memref<8x32xf32, #tpu.memory_space<vmem>>, vector<8x32xf32>
    %c0_1 = arith.constant 0 : index
    %c0_2 = arith.constant 0 : index
    %1 = vector.load %arg2[%c0_1, %c0_2] : memref<32x128xf32, #tpu.memory_space<vmem>>, vector<32x128xf32>
    %cst = arith.constant dense<0.000000e+00> : vector<8x128xf32>
    %2 = tpu.matmul %0, %1, %cst {dimension_numbers = #tpu.dot_dimension_numbers<[1], [0], [0], [1], [0, 0, 1, 1], [], []>} : vector<8x32xf32>, vector<32x128xf32>, vector<8x128xf32> -> vector<8x128xf32>
    %c0_3 = arith.constant 0 : index
    %c0_4 = arith.constant 0 : index
    %3 = vector.load %arg3[%c0_3, %c0_4] : memref<1x128xf32, #tpu.memory_space<vmem>>, vector<1x128xf32>
    %4 = vector.broadcast %3 : vector<1x128xf32> to vector<8x128xf32>
    %5 = arith.addf %2, %4 : vector<8x128xf32>
    %cst_5 = arith.constant 0.000000e+00 : f32
    %6 = vector.broadcast %cst_5 : f32 to vector<8x128xf32>
    %7 = arith.maximumf %5, %6 : vector<8x128xf32>
    %c0_6 = arith.constant 0 : index
    %c0_7 = arith.constant 0 : index
    %8 = vector.load %arg4[%c0_6, %c0_7] : memref<128x128xf32, #tpu.memory_space<vmem>>, vector<128x128xf32>
    %cst_8 = arith.constant dense<0.000000e+00> : vector<8x128xf32>
    %9 = tpu.matmul %7, %8, %cst_8 {dimension_numbers = #tpu.dot_dimension_numbers<[1], [0], [0], [1], [0, 0, 1, 1], [], []>} : vector<8x128xf32>, vector<128x128xf32>, vector<8x128xf32> -> vector<8x128xf32>
    %c0_9 = arith.constant 0 : index
    %c0_10 = arith.constant 0 : index
    %10 = vector.load %arg5[%c0_9, %c0_10] : memref<1x128xf32, #tpu.memory_space<vmem>>, vector<1x128xf32>
    %11 = vector.broadcast %10 : vector<1x128xf32> to vector<8x128xf32>
    %12 = arith.addf %9, %11 : vector<8x128xf32>
    %c0_11 = arith.constant 0 : index
    %c0_12 = arith.constant 0 : index
    %13 = vector.load %arg6[%c0_11, %c0_12] : memref<128x128xf32, #tpu.memory_space<vmem>>, vector<128x128xf32>
    %cst_13 = arith.constant dense<0.000000e+00> : vector<8x128xf32>
    %14 = tpu.matmul %12, %13, %cst_13 {dimension_numbers = #tpu.dot_dimension_numbers<[1], [0], [0], [1], [0, 0, 1, 1], [], []>} : vector<8x128xf32>, vector<128x128xf32>, vector<8x128xf32> -> vector<8x128xf32>
    %c0_14 = arith.constant 0 : index
    %c0_15 = arith.constant 0 : index
    %15 = vector.load %arg7[%c0_14, %c0_15] : memref<1x128xf32, #tpu.memory_space<vmem>>, vector<1x128xf32>
    %16 = vector.broadcast %15 : vector<1x128xf32> to vector<8x128xf32>
    %17 = arith.addf %14, %16 : vector<8x128xf32>
    %c0_16 = arith.constant 0 : index
    %c0_17 = arith.constant 0 : index
    %18 = vector.load %arg8[%c0_16, %c0_17] : memref<8x128xf32, #tpu.memory_space<vmem>>, vector<8x128xf32>
    tpu.vector_store %arg8[%c0_16, %c0_17], %17 {strides = array<i32>} : memref<8x128xf32, #tpu.memory_space<vmem>>, vector<8x128xf32>,
    return
  }
  func.func @transform_0(%arg0: i32) -> (i32, i32) {
    %c0_i32 = arith.constant 0 : i32
    %c0_i32_0 = arith.constant 0 : i32
    return %arg0, %c0_i32 : i32, i32
  }
  func.func @transform_1(%arg0: i32) -> (i32, i32) {
    %c0_i32 = arith.constant 0 : i32
    %c0_i32_0 = arith.constant 0 : i32
    %c0_i32_1 = arith.constant 0 : i32
    return %c0_i32, %c0_i32_0 : i32, i32
  }
  func.func @transform_2(%arg0: i32) -> (i32, i32) {
    %c0_i32 = arith.constant 0 : i32
    %c0_i32_0 = arith.constant 0 : i32
    %c0_i32_1 = arith.constant 0 : i32
    return %c0_i32, %c0_i32_0 : i32, i32
  }
  func.func @transform_3(%arg0: i32) -> (i32, i32) {
    %c0_i32 = arith.constant 0 : i32
    %c0_i32_0 = arith.constant 0 : i32
    %c0_i32_1 = arith.constant 0 : i32
    return %c0_i32, %c0_i32_0 : i32, i32
  }
  func.func @transform_4(%arg0: i32) -> (i32, i32) {
    %c0_i32 = arith.constant 0 : i32
    %c0_i32_0 = arith.constant 0 : i32
    %c0_i32_1 = arith.constant 0 : i32
    return %c0_i32, %c0_i32_0 : i32, i32
  }
  func.func @transform_5(%arg0: i32) -> (i32, i32) {
    %c0_i32 = arith.constant 0 : i32
    %c0_i32_0 = arith.constant 0 : i32
    %c0_i32_1 = arith.constant 0 : i32
    return %c0_i32, %c0_i32_0 : i32, i32
  }
  func.func @transform_6(%arg0: i32) -> (i32, i32) {
    %c0_i32 = arith.constant 0 : i32
    %c0_i32_0 = arith.constant 0 : i32
    %c0_i32_1 = arith.constant 0 : i32
    return %c0_i32, %c0_i32_0 : i32, i32
  }
  func.func @transform_7(%arg0: i32) -> (i32, i32) {
    %c0_i32 = arith.constant 0 : i32
    %c0_i32_0 = arith.constant 0 : i32
    return %arg0, %c0_i32 : i32, i32
  }
}

</mosaic_0001>

<llo_original>
// kernel: _fused_forward.1
$region0: #{_fused_forward.1}
  #allocation0 [shape = 'u32[]', space=smem, size = 0x4, offset = 0x4, fixed_abs, tag = 'smem constant byte address 0x4 - core index']
  #allocation1 [shape = 'u32[144,128]{1,0:T(1,128)}', space=vmem, size = 0x12000, scoped, tag = 'internal scratch']
  %s0 = inlined_call_operand.hbm [shape: f32[8,32], index: 0, kind: input, shape index: {}]
  %s1 = inlined_call_operand.hbm [shape: f32[32,128], index: 1, kind: input, shape index: {}]
  %s2 = inlined_call_operand.vmem [shape: f32[1,128], index: 2, kind: input, shape index: {}]
  %s3 = inlined_call_operand.hbm [shape: f32[128,128], index: 3, kind: input, shape index: {}]
  %s4 = inlined_call_operand.vmem [shape: f32[1,128], index: 4, kind: input, shape index: {}]
  %s5 = inlined_call_operand.hbm [shape: f32[128,128], index: 5, kind: input, shape index: {}]
  %s6 = inlined_call_operand.vmem [shape: f32[1,128], index: 6, kind: input, shape index: {}]
  %s7 = inlined_call_operand.hbm [shape: f32[8,128], index: 7, kind: output, shape index: {}]
  %s8 = sld [smem:[#allocation0]]
  $region54: #{_fused_forward.1} parent=0
    _
  %s10 = ssub.s32 1, %s8
  %s11 = scalar_select 0, %s10, %s8
  $region1: #{_fused_forward.1} parent=0
    #allocation2 [shape = 'u8[4096]{0}', space=vmem, size = 0x1000, scoped, tag = 'input window, operand 0, single buffered']
    #allocation3 [shape = 's32[1]{0}', space=sflag, size = 0x4, scoped, tag = 'scoped memory for _fused_forward.1']
    #allocation4 [shape = 's32[1]{0}', space=sflag, size = 0x4, scoped, tag = 'scoped memory for _fused_forward.1']
    #allocation5 [shape = 'u8[16384]{0}', space=vmem, size = 0x4000, scoped, tag = 'input window, operand 1, single buffered']
    #allocation6 [shape = 's32[1]{0}', space=sflag, size = 0x4, scoped, tag = 'scoped memory for _fused_forward.1']
    #allocation7 [shape = 'u8[65536]{0}', space=vmem, size = 0x10000, scoped, tag = 'input window, operand 3, single buffered']
    #allocation8 [shape = 'u8[65536]{0}', space=vmem, size = 0x10000, scoped, tag = 'input window, operand 5, single buffered']
    #allocation9 [shape = 's32[1]{0}', space=sflag, size = 0x4, scoped, tag = 'scoped memory for _fused_forward.1']
    #allocation10 [shape = 'u8[4096]{0}', space=vmem, size = 0x1000, scoped, tag = 'output window, operand 0, single buffered']
    %12 = vsyncpa [#allocation3], 0
    %13 = vsyncpa [#allocation6], 0
    %14 = vsyncpa [#allocation9], 0
    %15 = vsyncpa [#allocation4], 0
    // Predicated region
    $region2: #{_fused_forward.1} parent=1 // pred_check
      _
    $region3: #{_fused_forward.1} parent=1 // pred_check_branch
      %17 = sbr.rel (0) target = $region5
    $region4: #{_fused_forward.1} parent=1 // pred_region
      %s19 = ssub.s32 128, 128
      %20 = vsyncadd [#allocation3], %s19
      %s22 = sshll.u32 [#allocation2], 4
      %s23 = int_to_ptr.vmem [resolvable:$true] %s22
      %25 = dma.hbm_to_vmem [thread:$0]  %s0, 128, %s23, [#allocation3]
    $region5: #{_fused_forward.1} parent=1 // pred_fallthru
      _
    // Predicated region
    $region6: #{_fused_forward.1} parent=1 // pred_check
      _
    $region7: #{_fused_forward.1} parent=1 // pred_check_branch
      %27 = sbr.rel (0) target = $region9
    $region8: #{_fused_forward.1} parent=1 // pred_region
      %s29 = ssub.s32 512, 512
      %30 = vsyncadd [#allocation6], %s29
      %s31 = sshll.u32 [#allocation5], 4
      %s32 = int_to_ptr.vmem [resolvable:$true] %s31
      %37 = dma.hbm_to_vmem [thread:$0]  %s1, 512, %s32, [#allocation6], 128, 128, 8
    $region9: #{_fused_forward.1} parent=1 // pred_fallthru
      _
    // Predicated region
    $region10: #{_fused_forward.1} parent=1 // pred_check
      _
    $region11: #{_fused_forward.1} parent=1 // pred_check_branch
      %39 = sbr.rel (0) target = $region13
    $region12: #{_fused_forward.1} parent=1 // pred_region
      _
    $region13: #{_fused_forward.1} parent=1 // pred_fallthru
      _
    // Predicated region
    $region14: #{_fused_forward.1} parent=1 // pred_check
      _
    $region15: #{_fused_forward.1} parent=1 // pred_check_branch
      %41 = sbr.rel (0) target = $region17
    $region16: #{_fused_forward.1} parent=1 // pred_region
      %s43 = ssub.s32 2048, 2048
      %44 = vsyncadd [#allocation6], %s43
      %s45 = sshll.u32 [#allocation7], 4
      %s46 = int_to_ptr.vmem [resolvable:$true] %s45
      %51 = dma.hbm_to_vmem [thread:$0]  %s3, 2048, %s46, [#allocation6], 128, 128, 8
    $region17: #{_fused_forward.1} parent=1 // pred_fallthru
      _
    // Predicated region
    $region18: #{_fused_forward.1} parent=1 // pred_check
      _
    $region19: #{_fused_forward.1} parent=1 // pred_check_branch
      %53 = sbr.rel (0) target = $region21
    $region20: #{_fused_forward.1} parent=1 // pred_region
      _
    $region21: #{_fused_forward.1} parent=1 // pred_fallthru
      _
    // Predicated region
    $region22: #{_fused_forward.1} parent=1 // pred_check
      _
    $region23: #{_fused_forward.1} parent=1 // pred_check_branch
      %55 = sbr.rel (0) target = $region25
    $region24: #{_fused_forward.1} parent=1 // pred_region
      %s57 = ssub.s32 2048, 2048
      %58 = vsyncadd [#allocation9], %s57
      %s59 = sshll.u32 [#allocation8], 4
      %s60 = int_to_ptr.vmem [resolvable:$true] %s59
      %65 = dma.hbm_to_vmem [thread:$0]  %s5, 2048, %s60, [#allocation9], 128, 128, 8
    $region25: #{_fused_forward.1} parent=1 // pred_fallthru
      _
    // Predicated region
    $region26: #{_fused_forward.1} parent=1 // pred_check
      _
    $region27: #{_fused_forward.1} parent=1 // pred_check_branch
      %67 = sbr.rel (0) target = $region29
    $region28: #{_fused_forward.1} parent=1 // pred_region
      _
    $region29: #{_fused_forward.1} parent=1 // pred_fallthru
      _
    // Predicated region
    $region30: #{_fused_forward.1} parent=1 // pred_check
      _
    $region31: #{_fused_forward.1} parent=1 // pred_check_branch
      %69 = sbr.rel (0) target = $region33
    $region32: #{_fused_forward.1} parent=1 // pred_region
      %70 = dma.done [#allocation3], 128
    $region33: #{_fused_forward.1} parent=1 // pred_fallthru
      _
    // Predicated region
    $region34: #{_fused_forward.1} parent=1 // pred_check
      _
    $region35: #{_fused_forward.1} parent=1 // pred_check_branch
      %72 = sbr.rel (0) target = $region37
    $region36: #{_fused_forward.1} parent=1 // pred_region
      %73 = dma.done [#allocation6], 512
    $region37: #{_fused_forward.1} parent=1 // pred_fallthru
      _
    // Predicated region
    $region38: #{_fused_forward.1} parent=1 // pred_check
      _
    $region39: #{_fused_forward.1} parent=1 // pred_check_branch
      %75 = sbr.rel (0) target = $region41
    $region40: #{_fused_forward.1} parent=1 // pred_region
      %76 = dma.done [#allocation6], 2048
    $region41: #{_fused_forward.1} parent=1 // pred_fallthru
      _
    // Predicated region
    $region42: #{_fused_forward.1} parent=1 // pred_check
      _
    $region43: #{_fused_forward.1} parent=1 // pred_check_branch
      %78 = sbr.rel (0) target = $region45
    $region44: #{_fused_forward.1} parent=1 // pred_region
      %79 = dma.done [#allocation9], 2048
    $region45: #{_fused_forward.1} parent=1 // pred_fallthru
      _
    %v80 = vld [vmem:[#allocation2] sm:$0xff]
    %v81 = vld [vmem:[#allocation5] sm:$0xff]
    %v82 = vld [vmem:[#allocation5 + $0x8] sm:$0xff]
    %v83 = vld [vmem:[#allocation5 + $0x10] sm:$0xff]
    %v84 = vld [vmem:[#allocation5 + $0x18] sm:$0xff]
    %v85 = vld [vmem:[%s2] sm:$0x1]
    %v87 = vlaneseq
    %v88 = vshrl.u32 %v87, 7
    %v89 = vsub.s32 0, %v88
    %v90 = vrot.slane %v85, %v89
    %vm92 = vcmask 261120
    %v94 = vsel %vm92, %v80, 0
    %96 = vmatprep.subr.mxu0 0.0
    %97 = vmatpush1.msra.mxu0 %v81
    %98 = vmatprep.subr.mxu0 0.0
    %99 = vmatpush1.msra.mxu0 %v82
    %100 = vmatprep.subr.mxu0 0.0
    %101 = vmatpush1.msra.mxu0 %v83
    %102 = vmatprep.subr.mxu0 0.0
    %103 = vmatpush1.msra.mxu0 %v84
    %104 = vmatprep.subr.mxu0 0.0
    %105 = vmatpush1.msra.mxu0 0.0
    %106 = vmatprep.subr.mxu0 0.0
    %107 = vmatpush1.msra.mxu0 0.0
    %108 = vmatprep.subr.mxu0 0.0
    %109 = vmatpush1.msra.mxu0 0.0
    %110 = vmatprep.subr.mxu0 0.0
    %111 = vmatpush1.msra.mxu0 0.0
    %112 = vmatprep.subr.mxu0 0.0
    %113 = vmatpush1.msra.mxu0 0.0
    %114 = vmatprep.subr.mxu0 0.0
    %115 = vmatpush1.msra.mxu0 0.0
    %116 = vmatprep.subr.mxu0 0.0
    %117 = vmatpush1.msra.mxu0 0.0
    %118 = vmatprep.subr.mxu0 0.0
    %119 = vmatpush1.msra.mxu0 0.0
    %120 = vmatprep.subr.mxu0 0.0
    %121 = vmatpush1.msra.mxu0 0.0
    %122 = vmatprep.subr.mxu0 0.0
    %123 = vmatpush1.msra.mxu0 0.0
    %124 = vmatprep.subr.mxu0 0.0
    %125 = vmatpush1.msra.mxu0 0.0
    %126 = vmatprep.subr.mxu0 0.0
    %127 = vmatpush1.msra.mxu0 0.0
    %128 = vmatprep.subr.mxu0 0.0
    %129 = vmatpush1.msra.mxu0 0.0
    %130 = vmatprep.subr.mxu0 0.0
    %131 = vmatpush1.msra.mxu0 0.0
    %132 = vmatprep.subr.mxu0 0.0
    %133 = vmatpush1.msra.mxu0 0.0
    %134 = vmatprep.subr.mxu0 0.0
    %135 = vmatpush1.msra.mxu0 0.0
    %136 = vmatprep.subr.mxu0 0.0
    %137 = vmatpush1.msra.mxu0 0.0
    %138 = vmatprep.subr.mxu0 0.0
    %139 = vmatpush1.msra.mxu0 0.0
    %140 = vmatprep.subr.mxu0 0.0
    %141 = vmatpush1.msra.mxu0 0.0
    %142 = vmatprep.subr.mxu0 0.0
    %143 = vmatpush1.msra.mxu0 0.0
    %144 = vmatprep.subr.mxu0 0.0
    %145 = vmatpush1.msra.mxu0 0.0
    %146 = vmatprep.subr.mxu0 0.0
    %147 = vmatpush1.msra.mxu0 0.0
    %148 = vmatprep.subr.mxu0 0.0
    %149 = vmatpush1.msra.mxu0 0.0
    %150 = vmatprep.subr.mxu0 0.0
    %151 = vmatpush1.msra.mxu0 0.0
    %152 = vmatprep.subr.mxu0 0.0
    %153 = vmatpush1.msra.mxu0 0.0
    %154 = vmatprep.subr.mxu0 0.0
    %155 = vmatpush1.msra.mxu0 0.0
    %156 = vmatprep.subr.mxu0 0.0
    %157 = vmatpush1.msra.mxu0 0.0
    %158 = vmatprep.subr.mxu0 0.0
    %159 = vmatpush1.msra.mxu0 0.0
    %160 = vmatprep.mubr.f32.mxu0 0.0
    %161 = vmatmul.mubr.f32.gmra.mrb[0].mxu0 %v94
    %v162 = vpop.f32.mrb[0].mxu0
    %v163 = vadd.f32 %v90, %v162
    %v164 = vpop.f32.mrb[0].mxu0
    %165 = vdwg.mxu0
    %v166 = vmax.f32 %v163, 0.0
    %v167 = vld [vmem:[#allocation7] sm:$0xff]
    %v168 = vld [vmem:[#allocation7 + $0x8] sm:$0xff]
    %v169 = vld [vmem:[#allocation7 + $0x10] sm:$0xff]
    %v170 = vld [vmem:[#allocation7 + $0x18] sm:$0xff]
    %v171 = vld [vmem:[#allocation7 + $0x20] sm:$0xff]
    %v172 = vld [vmem:[#allocation7 + $0x28] sm:$0xff]
    %v173 = vld [vmem:[#allocation7 + $0x30] sm:$0xff]
    %v174 = vld [vmem:[#allocation7 + $0x38] sm:$0xff]
    %v175 = vld [vmem:[#allocation7 + $0x40] sm:$0xff]
    %v176 = vld [vmem:[#allocation7 + $0x48] sm:$0xff]
    %v177 = vld [vmem:[#allocation7 + $0x50] sm:$0xff]
    %v178 = vld [vmem:[#allocation7 + $0x58] sm:$0xff]
    %v179 = vld [vmem:[#allocation7 + $0x60] sm:$0xff]
    %v180 = vld [vmem:[#allocation7 + $0x68] sm:$0xff]
    %v181 = vld [vmem:[#allocation7 + $0x70] sm:$0xff]
    %v182 = vld [vmem:[#allocation7 + $0x78] sm:$0xff]
    %v183 = vld [vmem:[%s4] sm:$0x1]
    %v185 = vlaneseq
    %v186 = vshrl.u32 %v185, 7
    %v187 = vsub.s32 0, %v186
    %v188 = vrot.slane %v183, %v187
    %190 = vmatprep.subr.mxu0 0.0
    %191 = vmatpush1.msra.mxu0 %v167
    %192 = vmatprep.subr.mxu0 0.0
    %193 = vmatpush1.msra.mxu0 %v168
    %194 = vmatprep.subr.mxu0 0.0
    %195 = vmatpush1.msra.mxu0 %v169
    %196 = vmatprep.subr.mxu0 0.0
    %197 = vmatpush1.msra.mxu0 %v170
    %198 = vmatprep.subr.mxu0 0.0
    %199 = vmatpush1.msra.mxu0 %v171
    %200 = vmatprep.subr.mxu0 0.0
    %201 = vmatpush1.msra.mxu0 %v172
    %202 = vmatprep.subr.mxu0 0.0
    %203 = vmatpush1.msra.mxu0 %v173
    %204 = vmatprep.subr.mxu0 0.0
    %205 = vmatpush1.msra.mxu0 %v174
    %206 = vmatprep.subr.mxu0 0.0
    %207 = vmatpush1.msra.mxu0 %v175
    %208 = vmatprep.subr.mxu0 0.0
    %209 = vmatpush1.msra.mxu0 %v176
    %210 = vmatprep.subr.mxu0 0.0
    %211 = vmatpush1.msra.mxu0 %v177
    %212 = vmatprep.subr.mxu0 0.0
    %213 = vmatpush1.msra.mxu0 %v178
    %214 = vmatprep.subr.mxu0 0.0
    %215 = vmatpush1.msra.mxu0 %v179
    %216 = vmatprep.subr.mxu0 0.0
    %217 = vmatpush1.msra.mxu0 %v180
    %218 = vmatprep.subr.mxu0 0.0
    %219 = vmatpush1.msra.mxu0 %v181
    %220 = vmatprep.subr.mxu0 0.0
    %221 = vmatpush1.msra.mxu0 %v182
    %222 = vmatprep.subr.mxu0 0.0
    %223 = vmatpush1.msra.mxu0 0.0
    %224 = vmatprep.subr.mxu0 0.0
    %225 = vmatpush1.msra.mxu0 0.0
    %226 = vmatprep.subr.mxu0 0.0
    %227 = vmatpush1.msra.mxu0 0.0
    %228 = vmatprep.subr.mxu0 0.0
    %229 = vmatpush1.msra.mxu0 0.0
    %230 = vmatprep.subr.mxu0 0.0
    %231 = vmatpush1.msra.mxu0 0.0
    %232 = vmatprep.subr.mxu0 0.0
    %233 = vmatpush1.msra.mxu0 0.0
    %234 = vmatprep.subr.mxu0 0.0
    %235 = vmatpush1.msra.mxu0 0.0
    %236 = vmatprep.subr.mxu0 0.0
    %237 = vmatpush1.msra.mxu0 0.0
    %238 = vmatprep.subr.mxu0 0.0
    %239 = vmatpush1.msra.mxu0 0.0
    %240 = vmatprep.subr.mxu0 0.0
    %241 = vmatpush1.msra.mxu0 0.0
    %242 = vmatprep.subr.mxu0 0.0
    %243 = vmatpush1.msra.mxu0 0.0
    %244 = vmatprep.subr.mxu0 0.0
    %245 = vmatpush1.msra.mxu0 0.0
    %246 = vmatprep.subr.mxu0 0.0
    %247 = vmatpush1.msra.mxu0 0.0
    %248 = vmatprep.subr.mxu0 0.0
    %249 = vmatpush1.msra.mxu0 0.0
    %250 = vmatprep.subr.mxu0 0.0
    %251 = vmatpush1.msra.mxu0 0.0
    %252 = vmatprep.subr.mxu0 0.0
    %253 = vmatpush1.msra.mxu0 0.0
    %254 = vmatprep.mubr.f32.mxu0 0.0
    %255 = vmatmul.mubr.f32.gmra.mrb[0].mxu0 %v166
    %v256 = vpop.f32.mrb[0].mxu0
    %v257 = vadd.f32 %v188, %v256
    %v258 = vpop.f32.mrb[0].mxu0
    %259 = vdwg.mxu0
    %v260 = vld [vmem:[#allocation8] sm:$0xff]
    %v261 = vld [vmem:[#allocation8 + $0x8] sm:$0xff]
    %v262 = vld [vmem:[#allocation8 + $0x10] sm:$0xff]
    %v263 = vld [vmem:[#allocation8 + $0x18] sm:$0xff]
    %v264 = vld [vmem:[#allocation8 + $0x20] sm:$0xff]
    %v265 = vld [vmem:[#allocation8 + $0x28] sm:$0xff]
    %v266 = vld [vmem:[#allocation8 + $0x30] sm:$0xff]
    %v267 = vld [vmem:[#allocation8 + $0x38] sm:$0xff]
    %v268 = vld [vmem:[#allocation8 + $0x40] sm:$0xff]
    %v269 = vld [vmem:[#allocation8 + $0x48] sm:$0xff]
    %v270 = vld [vmem:[#allocation8 + $0x50] sm:$0xff]
    %v271 = vld [vmem:[#allocation8 + $0x58] sm:$0xff]
    %v272 = vld [vmem:[#allocation8 + $0x60] sm:$0xff]
    %v273 = vld [vmem:[#allocation8 + $0x68] sm:$0xff]
    %v274 = vld [vmem:[#allocation8 + $0x70] sm:$0xff]
    %v275 = vld [vmem:[#allocation8 + $0x78] sm:$0xff]
    %v276 = vld [vmem:[%s6] sm:$0x1]
    %v278 = vlaneseq
    %v279 = vshrl.u32 %v278, 7
    %v280 = vsub.s32 0, %v279
    %v281 = vrot.slane %v276, %v280
    %283 = vmatprep.subr.mxu0 0.0
    %284 = vmatpush1.msra.mxu0 %v260
    %285 = vmatprep.subr.mxu0 0.0
    %286 = vmatpush1.msra.mxu0 %v261
    %287 = vmatprep.subr.mxu0 0.0
    %288 = vmatpush1.msra.mxu0 %v262
    %289 = vmatprep.subr.mxu0 0.0
    %290 = vmatpush1.msra.mxu0 %v263
    %291 = vmatprep.subr.mxu0 0.0
    %292 = vmatpush1.msra.mxu0 %v264
    %293 = vmatprep.subr.mxu0 0.0
    %294 = vmatpush1.msra.mxu0 %v265
    %295 = vmatprep.subr.mxu0 0.0
    %296 = vmatpush1.msra.mxu0 %v266
    %297 = vmatprep.subr.mxu0 0.0
    %298 = vmatpush1.msra.mxu0 %v267
    %299 = vmatprep.subr.mxu0 0.0
    %300 = vmatpush1.msra.mxu0 %v268
    %301 = vmatprep.subr.mxu0 0.0
    %302 = vmatpush1.msra.mxu0 %v269
    %303 = vmatprep.subr.mxu0 0.0
    %304 = vmatpush1.msra.mxu0 %v270
    %305 = vmatprep.subr.mxu0 0.0
    %306 = vmatpush1.msra.mxu0 %v271
    %307 = vmatprep.subr.mxu0 0.0
    %308 = vmatpush1.msra.mxu0 %v272
    %309 = vmatprep.subr.mxu0 0.0
    %310 = vmatpush1.msra.mxu0 %v273
    %311 = vmatprep.subr.mxu0 0.0
    %312 = vmatpush1.msra.mxu0 %v274
    %313 = vmatprep.subr.mxu0 0.0
    %314 = vmatpush1.msra.mxu0 %v275
    %315 = vmatprep.subr.mxu0 0.0
    %316 = vmatpush1.msra.mxu0 0.0
    %317 = vmatprep.subr.mxu0 0.0
    %318 = vmatpush1.msra.mxu0 0.0
    %319 = vmatprep.subr.mxu0 0.0
    %320 = vmatpush1.msra.mxu0 0.0
    %321 = vmatprep.subr.mxu0 0.0
    %322 = vmatpush1.msra.mxu0 0.0
    %323 = vmatprep.subr.mxu0 0.0
    %324 = vmatpush1.msra.mxu0 0.0
    %325 = vmatprep.subr.mxu0 0.0
    %326 = vmatpush1.msra.mxu0 0.0
    %327 = vmatprep.subr.mxu0 0.0
    %328 = vmatpush1.msra.mxu0 0.0
    %329 = vmatprep.subr.mxu0 0.0
    %330 = vmatpush1.msra.mxu0 0.0
    %331 = vmatprep.subr.mxu0 0.0
    %332 = vmatpush1.msra.mxu0 0.0
    %333 = vmatprep.subr.mxu0 0.0
    %334 = vmatpush1.msra.mxu0 0.0
    %335 = vmatprep.subr.mxu0 0.0
    %336 = vmatpush1.msra.mxu0 0.0
    %337 = vmatprep.subr.mxu0 0.0
    %338 = vmatpush1.msra.mxu0 0.0
    %339 = vmatprep.subr.mxu0 0.0
    %340 = vmatpush1.msra.mxu0 0.0
    %341 = vmatprep.subr.mxu0 0.0
    %342 = vmatpush1.msra.mxu0 0.0
    %343 = vmatprep.subr.mxu0 0.0
    %344 = vmatpush1.msra.mxu0 0.0
    %345 = vmatprep.subr.mxu0 0.0
    %346 = vmatpush1.msra.mxu0 0.0
    %347 = vmatprep.mubr.f32.mxu0 0.0
    %348 = vmatmul.mubr.f32.gmra.mrb[0].mxu0 %v257
    %v349 = vpop.f32.mrb[0].mxu0
    %v350 = vadd.f32 %v281, %v349
    %v351 = vpop.f32.mrb[0].mxu0
    %352 = vdwg.mxu0
    %353 = vst [vmem:[#allocation10] sm:$0xff] %v350
    // Predicated region
    $region46: #{_fused_forward.1} parent=1 // pred_check
      _
    $region47: #{_fused_forward.1} parent=1 // pred_check_branch
      %355 = sbr.rel (0) target = $region49
    $region48: #{_fused_forward.1} parent=1 // pred_region
      %s357 = ssub.s32 128, 128
      %358 = vsyncadd [#allocation4], %s357
      %s360 = sshll.u32 [#allocation10], 4
      %s361 = int_to_ptr.vmem [resolvable:$true] %s360
      %363 = dma.vmem_to_hbm [thread:$0]  %s361, 128, %s7, [#allocation4]
    $region49: #{_fused_forward.1} parent=1 // pred_fallthru
      _
    // Predicated region
    $region50: #{_fused_forward.1} parent=1 // pred_check
      _
    $region51: #{_fused_forward.1} parent=1 // pred_check_branch
      %365 = sbr.rel (0) target = $region53
    $region52: #{_fused_forward.1} parent=1 // pred_region
      %366 = dma.done [#allocation4], 128
    $region53: #{_fused_forward.1} parent=1 // pred_fallthru
      _
    %367 = vsyncpa [#allocation3], 1
    %368 = vsyncpa [#allocation6], 1
    %369 = vsyncpa [#allocation9], 1
    %370 = vsyncpa [#allocation4], 1

</llo_original>
